<compile_context>
chip_gen: v5e
topology: v5e:2x2
jax: 0.10.0
libtpu: 0.0.40
codegen_flags: <defaults>
</compile_context>

<pallas_src>
import jax
import jax.numpy as jnp
from jax.experimental import pallas as pl
from jax.experimental.pallas import tpu as pltpu

BN_EPS = 1e-5
_VMEM_LIMIT = 32 * 1024 * 1024  # safe on v5e/v6e (128 MiB) and v7x (64 MiB)


def _conv1x1(w, x):
    """(Cout, Cin) @ (Cin, W) -> (Cout, W) channel contraction, W on lanes.

    For CoordAtt's tiny channel counts (4..8) an unrolled broadcast
    multiply-add on the VPU beats a mostly-idle MXU pass; fall back to the
    MXU for larger channel counts.
    """
    cout, cin = w.shape
    if cin <= 16:
        acc = w[:, 0:1] * x[0:1, :]
        for c in range(1, cin):
            acc = acc + w[:, c:c + 1] * x[c:c + 1, :]
        return acc
    return jnp.dot(w, x, preferred_element_type=jnp.float32)


def stats_kernel(x_ref, w1_ref, sum_ref, sumsq_ref):
    """Accumulate per-channel sum / sum-of-squares of conv1 output."""
    @pl.when(pl.program_id(0) == 0)
    def _():
        sum_ref[...] = jnp.zeros_like(sum_ref)
        sumsq_ref[...] = jnp.zeros_like(sumsq_ref)

    x = x_ref[0].astype(jnp.float32)                # (C, W)
    w1 = w1_ref[...].astype(jnp.float32)            # (mip, C)

    y = _conv1x1(w1, x)                             # conv1 on the W positions
    x_pool = jnp.max(x, axis=1, keepdims=True)      # AdaptiveMaxPool1d(1): (C, 1)
    y_pool = _conv1x1(w1, x_pool)                   # conv1 on pooled column: (mip, 1)

    sum_ref[...] += jnp.sum(y, axis=1, keepdims=True) + y_pool
    sumsq_ref[...] += jnp.sum(y * y, axis=1, keepdims=True) + y_pool * y_pool


def apply_kernel(x_ref, w1_ref, scale_ref, shift_ref, w2_ref, b2_ref, out_ref):
    """Apply conv1 -> (folded) BN -> Mish -> conv_w -> sigmoid gate -> multiply."""
    x = x_ref[0].astype(jnp.float32)                # (C, W)
    w1 = w1_ref[...].astype(jnp.float32)            # (mip, C)

    y = _conv1x1(w1, x)                             # (mip, W)
    y = y * scale_ref[...] + shift_ref[...]         # BatchNorm folded into FMA

    # Mish(y) = y * tanh(softplus(y)) == y * (1 - 2 / (1 + (1 + e^y)^2))
    t = 1.0 + jnp.exp(y)
    y = y * (1.0 - 2.0 / (1.0 + t * t))

    a = _conv1x1(w2_ref[...].astype(jnp.float32), y) + b2_ref[...]   # (oup, W)
    a = 1.0 / (1.0 + jnp.exp(-a))                   # sigmoid

    out_ref[0] = (x * a).astype(out_ref.dtype)


def coord_att(x_ncw, w1, b1, gamma, beta, w2, b2):
    """x_ncw: (N, C, W) as in PyTorch Conv1d. Returns (N, C, W)."""
    N, C, W = x_ncw.shape
    mip = w1.shape[0]
    oup = w2.shape[0]

    # b1 is a per-channel constant immediately followed by batch-stats
    # BatchNorm: the mean subtraction cancels it exactly -> dead work.
    del b1

    w1 = jnp.reshape(w1, (mip, C)).astype(jnp.float32)
    w2 = jnp.reshape(w2, (oup, mip)).astype(jnp.float32)
    b2c = jnp.reshape(b2, (oup, 1)).astype(jnp.float32)

    # ---- Pass 1: BN batch statistics over the N*(W+1) positions. ----
    s, ss = pl.pallas_call(
        stats_kernel,
        grid=(N,),
        in_specs=[pl.BlockSpec((1, C, W), lambda n: (n, 0, 0)),
                  pl.BlockSpec((mip, C), lambda n: (0, 0))],
        out_specs=[pl.BlockSpec((mip, 1), lambda n: (0, 0)),
                   pl.BlockSpec((mip, 1), lambda n: (0, 0))],
        out_shape=[jax.ShapeDtypeStruct((mip, 1), jnp.float32),
                   jax.ShapeDtypeStruct((mip, 1), jnp.float32)],
        compiler_params=pltpu.CompilerParams(
            dimension_semantics=("arbitrary",),      # accumulator across grid
            vmem_limit_bytes=_VMEM_LIMIT),
    )(x_ncw, w1)

    count = jnp.float32(N * (W + 1))
    mean = s / count                                 # (mip, 1)
    var = ss / count - mean * mean                   # biased variance
    inv_std = jax.lax.rsqrt(var + BN_EPS)
    scale = jnp.reshape(gamma, (mip, 1)).astype(jnp.float32) * inv_std
    shift = jnp.reshape(beta, (mip, 1)).astype(jnp.float32) - mean * scale

    # ---- Pass 2: apply the gate, batch axis parallel across TensorCores. ----
    out = pl.pallas_call(
        apply_kernel,
        grid=(N,),
        in_specs=[pl.BlockSpec((1, C, W), lambda n: (n, 0, 0)),
                  pl.BlockSpec((mip, C), lambda n: (0, 0)),
                  pl.BlockSpec((mip, 1), lambda n: (0, 0)),
                  pl.BlockSpec((mip, 1), lambda n: (0, 0)),
                  pl.BlockSpec((oup, mip), lambda n: (0, 0)),
                  pl.BlockSpec((oup, 1), lambda n: (0, 0))],
        out_specs=pl.BlockSpec((1, oup, W), lambda n: (n, 0, 0)),
        out_shape=jax.ShapeDtypeStruct((N, oup, W), x_ncw.dtype),
        compiler_params=pltpu.CompilerParams(
            dimension_semantics=("parallel",),
            vmem_limit_bytes=_VMEM_LIMIT),
    )(x_ncw, w1, scale, shift, w2, b2c)
    return out


def coord_att_reference(x_ncw, w1, b1, gamma, beta, w2, b2):
    """Pure-JAX reference mirroring the PyTorch forward (NCW layout)."""
    x = x_ncw.astype(jnp.float32)                    # (N, C, W)
    x_w = jnp.max(x, axis=2, keepdims=True)          # AdaptiveMaxPool1d(1)
    y = jnp.concatenate([x, x_w], axis=2)            # (N, C, W+1)
    y = jnp.einsum("ncl,mc->nml", y, w1) + b1.reshape(1, -1, 1)
    mean = jnp.mean(y, axis=(0, 2), keepdims=True)
    var = jnp.mean((y - mean) ** 2, axis=(0, 2), keepdims=True)
    y = (y - mean) / jnp.sqrt(var + BN_EPS)
    y = y * gamma.reshape(1, -1, 1) + beta.reshape(1, -1, 1)
    y = y * jnp.tanh(jax.nn.softplus(y))             # Mish
    y_w = y[:, :, :x.shape[2]]
    a = jnp.einsum("nml,om->nol", y_w, w2) + b2.reshape(1, -1, 1)
    a = jax.nn.sigmoid(a)
    return x * a


if __name__ == "__main__":
    # Small shapes consistent with the module: (batch, channels, width)
    N, C, W = 2, 4, 16
    inp = oup = C
    reduction = 32
    mip = max(6, inp // reduction)                   # = 6

    key = jax.random.PRNGKey(0)
    k_x, k_w1, k_b1, k_w2, k_b2 = jax.random.split(key, 5)

    x = jax.random.normal(k_x, (N, C, W), dtype=jnp.float32)

    # Deterministic synthetic parameters (Conv1d k=1 weights squeezed to 2D).
    w1 = 0.1 * jax.random.normal(k_w1, (mip, inp), dtype=jnp.float32)   # conv1.weight
    b1 = 0.1 * jax.random.normal(k_b1, (mip,), dtype=jnp.float32)       # conv1.bias
    gamma = jnp.ones((mip,), dtype=jnp.float32)                         # bn1.weight
    beta = jnp.zeros((mip,), dtype=jnp.float32)                         # bn1.bias
    w2 = 0.1 * jax.random.normal(k_w2, (oup, mip), dtype=jnp.float32)   # conv_w.weight
    b2 = 0.1 * jax.random.normal(k_b2, (oup,), dtype=jnp.float32)       # conv_w.bias

    out = coord_att(x, w1, b1, gamma, beta, w2, b2)
    out = jax.block_until_ready(out)

    ref = coord_att_reference(x, w1, b1, gamma, beta, w2, b2)
    assert out.shape == (N, C, W)
    assert jnp.allclose(out, ref, atol=1e-4, rtol=1e-4), "mismatch vs reference"

    print("KERNEL_OK")
</pallas_src>

<mosaic_0001>
module attributes {stable_mosaic.version = 11 : i64} {
  func.func @stats_kernel(%arg0: i32, %arg1: memref<1x4x16xf32, #tpu.memory_space<vmem>>, %arg2: memref<6x4xf32, #tpu.memory_space<vmem>>, %arg3: memref<6x1xf32, #tpu.memory_space<vmem>>, %arg4: memref<6x1xf32, #tpu.memory_space<vmem>>) attributes {dimension_semantics = [#tpu.dimension_semantics<arbitrary>], iteration_bounds = array<i64: 2>, scalar_prefetch = 0 : i64, scratch_operands = 0 : i64, tpu.core_type = #tpu.core_type<tc>, window_params = [{transform_indices = @transform_0, window_bounds = array<i64: 1, 4, 16>}, {pipeline_mode = #tpu.pipeline_mode<synchronous>, transform_indices = @transform_1, window_bounds = array<i64: 6, 4>}, {pipeline_mode = #tpu.pipeline_mode<synchronous>, transform_indices = @transform_2, window_bounds = array<i64: 6, 1>}, {pipeline_mode = #tpu.pipeline_mode<synchronous>, transform_indices = @transform_3, window_bounds = array<i64: 6, 1>}]} {
    %c0_i32 = arith.constant 0 : i32
    %0 = arith.cmpi eq, %arg0, %c0_i32 : i32
    %1 = arith.extui %0 : i1 to i32
    %c0_i32_0 = arith.constant 0 : i32
    %2 = arith.cmpi ne, %1, %c0_i32_0 : i32
    scf.if %2 {
      %cst_15 = arith.constant 0.000000e+00 : f32
      %64 = vector.broadcast %cst_15 : f32 to vector<6x1xf32>
      %c0_16 = arith.constant 0 : index
      %c0_17 = arith.constant 0 : index
      %65 = vector.load %arg3[%c0_16, %c0_17] : memref<6x1xf32, #tpu.memory_space<vmem>>, vector<6x1xf32>
      tpu.vector_store %arg3[%c0_16, %c0_17], %64 {strides = array<i32>} : memref<6x1xf32, #tpu.memory_space<vmem>>, vector<6x1xf32>,
      %cst_18 = arith.constant 0.000000e+00 : f32
      %66 = vector.broadcast %cst_18 : f32 to vector<6x1xf32>
      %c0_19 = arith.constant 0 : index
      %c0_20 = arith.constant 0 : index
      %67 = vector.load %arg4[%c0_19, %c0_20] : memref<6x1xf32, #tpu.memory_space<vmem>>, vector<6x1xf32>
      tpu.vector_store %arg4[%c0_19, %c0_20], %66 {strides = array<i32>} : memref<6x1xf32, #tpu.memory_space<vmem>>, vector<6x1xf32>,
    } else {
    }
    %c0 = arith.constant 0 : index
    %c0_1 = arith.constant 0 : index
    %c0_2 = arith.constant 0 : index
    %3 = vector.load %arg1[%c0, %c0_1, %c0_2] : memref<1x4x16xf32, #tpu.memory_space<vmem>>, vector<1x4x16xf32>
    %4 = vector.shape_cast %3 : vector<1x4x16xf32> to vector<4x16xf32>
    %c0_3 = arith.constant 0 : index
    %c0_4 = arith.constant 0 : index
    %5 = vector.load %arg2[%c0_3, %c0_4] : memref<6x4xf32, #tpu.memory_space<vmem>>, vector<6x4xf32>
    %6 = vector.extract_strided_slice %5 {offsets = [0, 0], sizes = [6, 1], strides = [1, 1]} : vector<6x4xf32> to vector<6x1xf32>
    %7 = vector.extract_strided_slice %4 {offsets = [0, 0], sizes = [1, 16], strides = [1, 1]} : vector<4x16xf32> to vector<1x16xf32>
    %8 = vector.broadcast %6 : vector<6x1xf32> to vector<6x16xf32>
    %9 = vector.broadcast %7 : vector<1x16xf32> to vector<6x16xf32>
    %10 = arith.mulf %8, %9 : vector<6x16xf32>
    %11 = vector.extract_strided_slice %5 {offsets = [0, 1], sizes = [6, 1], strides = [1, 1]} : vector<6x4xf32> to vector<6x1xf32>
    %12 = vector.extract_strided_slice %4 {offsets = [1, 0], sizes = [1, 16], strides = [1, 1]} : vector<4x16xf32> to vector<1x16xf32>
    %13 = vector.broadcast %11 : vector<6x1xf32> to vector<6x16xf32>
    %14 = vector.broadcast %12 : vector<1x16xf32> to vector<6x16xf32>
    %15 = arith.mulf %13, %14 : vector<6x16xf32>
    %16 = arith.addf %10, %15 : vector<6x16xf32>
    %17 = vector.extract_strided_slice %5 {offsets = [0, 2], sizes = [6, 1], strides = [1, 1]} : vector<6x4xf32> to vector<6x1xf32>
    %18 = vector.extract_strided_slice %4 {offsets = [2, 0], sizes = [1, 16], strides = [1, 1]} : vector<4x16xf32> to vector<1x16xf32>
    %19 = vector.broadcast %17 : vector<6x1xf32> to vector<6x16xf32>
    %20 = vector.broadcast %18 : vector<1x16xf32> to vector<6x16xf32>
    %21 = arith.mulf %19, %20 : vector<6x16xf32>
    %22 = arith.addf %16, %21 : vector<6x16xf32>
    %23 = vector.extract_strided_slice %5 {offsets = [0, 3], sizes = [6, 1], strides = [1, 1]} : vector<6x4xf32> to vector<6x1xf32>
    %24 = vector.extract_strided_slice %4 {offsets = [3, 0], sizes = [1, 16], strides = [1, 1]} : vector<4x16xf32> to vector<1x16xf32>
    %25 = vector.broadcast %23 : vector<6x1xf32> to vector<6x16xf32>
    %26 = vector.broadcast %24 : vector<1x16xf32> to vector<6x16xf32>
    %27 = arith.mulf %25, %26 : vector<6x16xf32>
    %28 = arith.addf %22, %27 : vector<6x16xf32>
    %cst = arith.constant dense<0xFF800000> : vector<4xf32>
    %29 = vector.multi_reduction <maximumf>, %4, %cst [1] : vector<4x16xf32> to vector<4xf32>
    %30 = vector.shape_cast %29 : vector<4xf32> to vector<4x1xf32>
    %31 = vector.extract_strided_slice %5 {offsets = [0, 0], sizes = [6, 1], strides = [1, 1]} : vector<6x4xf32> to vector<6x1xf32>
    %32 = vector.extract_strided_slice %30 {offsets = [0, 0], sizes = [1, 1], strides = [1, 1]} : vector<4x1xf32> to vector<1x1xf32>
    %33 = vector.broadcast %32 : vector<1x1xf32> to vector<6x1xf32>
    %34 = arith.mulf %31, %33 : vector<6x1xf32>
    %35 = vector.extract_strided_slice %5 {offsets = [0, 1], sizes = [6, 1], strides = [1, 1]} : vector<6x4xf32> to vector<6x1xf32>
    %36 = vector.extract_strided_slice %30 {offsets = [1, 0], sizes = [1, 1], strides = [1, 1]} : vector<4x1xf32> to vector<1x1xf32>
    %37 = vector.broadcast %36 : vector<1x1xf32> to vector<6x1xf32>
    %38 = arith.mulf %35, %37 : vector<6x1xf32>
    %39 = arith.addf %34, %38 : vector<6x1xf32>
    %40 = vector.extract_strided_slice %5 {offsets = [0, 2], sizes = [6, 1], strides = [1, 1]} : vector<6x4xf32> to vector<6x1xf32>
    %41 = vector.extract_strided_slice %30 {offsets = [2, 0], sizes = [1, 1], strides = [1, 1]} : vector<4x1xf32> to vector<1x1xf32>
    %42 = vector.broadcast %41 : vector<1x1xf32> to vector<6x1xf32>
    %43 = arith.mulf %40, %42 : vector<6x1xf32>
    %44 = arith.addf %39, %43 : vector<6x1xf32>
    %45 = vector.extract_strided_slice %5 {offsets = [0, 3], sizes = [6, 1], strides = [1, 1]} : vector<6x4xf32> to vector<6x1xf32>
    %46 = vector.extract_strided_slice %30 {offsets = [3, 0], sizes = [1, 1], strides = [1, 1]} : vector<4x1xf32> to vector<1x1xf32>
    %47 = vector.broadcast %46 : vector<1x1xf32> to vector<6x1xf32>
    %48 = arith.mulf %45, %47 : vector<6x1xf32>
    %49 = arith.addf %44, %48 : vector<6x1xf32>
    %c0_5 = arith.constant 0 : index
    %c0_6 = arith.constant 0 : index
    %50 = vector.load %arg3[%c0_5, %c0_6] : memref<6x1xf32, #tpu.memory_space<vmem>>, vector<6x1xf32>
    %cst_7 = arith.constant dense<0.000000e+00> : vector<6xf32>
    %51 = vector.multi_reduction <add>, %28, %cst_7 [1] : vector<6x16xf32> to vector<6xf32>
    %52 = vector.shape_cast %51 : vector<6xf32> to vector<6x1xf32>
    %53 = arith.addf %52, %49 : vector<6x1xf32>
    %54 = arith.addf %50, %53 : vector<6x1xf32>
    %c0_8 = arith.constant 0 : index
    %c0_9 = arith.constant 0 : index
    %55 = vector.load %arg3[%c0_8, %c0_9] : memref<6x1xf32, #tpu.memory_space<vmem>>, vector<6x1xf32>
    tpu.vector_store %arg3[%c0_8, %c0_9], %54 {strides = array<i32>} : memref<6x1xf32, #tpu.memory_space<vmem>>, vector<6x1xf32>,
    %c0_10 = arith.constant 0 : index
    %c0_11 = arith.constant 0 : index
    %56 = vector.load %arg4[%c0_10, %c0_11] : memref<6x1xf32, #tpu.memory_space<vmem>>, vector<6x1xf32>
    %57 = arith.mulf %28, %28 : vector<6x16xf32>
    %cst_12 = arith.constant dense<0.000000e+00> : vector<6xf32>
    %58 = vector.multi_reduction <add>, %57, %cst_12 [1] : vector<6x16xf32> to vector<6xf32>
    %59 = vector.shape_cast %58 : vector<6xf32> to vector<6x1xf32>
    %60 = arith.mulf %49, %49 : vector<6x1xf32>
    %61 = arith.addf %59, %60 : vector<6x1xf32>
    %62 = arith.addf %56, %61 : vector<6x1xf32>
    %c0_13 = arith.constant 0 : index
    %c0_14 = arith.constant 0 : index
    %63 = vector.load %arg4[%c0_13, %c0_14] : memref<6x1xf32, #tpu.memory_space<vmem>>, vector<6x1xf32>
    tpu.vector_store %arg4[%c0_13, %c0_14], %62 {strides = array<i32>} : memref<6x1xf32, #tpu.memory_space<vmem>>, vector<6x1xf32>,
    return
  }
  func.func @transform_0(%arg0: i32) -> (i32, i32, i32) {
    %c0_i32 = arith.constant 0 : i32
    %c0_i32_0 = arith.constant 0 : i32
    %c0_i32_1 = arith.constant 0 : i32
    return %arg0, %c0_i32, %c0_i32_0 : i32, i32, i32
  }
  func.func @transform_1(%arg0: i32) -> (i32, i32) {
    %c0_i32 = arith.constant 0 : i32
    %c0_i32_0 = arith.constant 0 : i32
    %c0_i32_1 = arith.constant 0 : i32
    return %c0_i32, %c0_i32_0 : i32, i32
  }
  func.func @transform_2(%arg0: i32) -> (i32, i32) {
    %c0_i32 = arith.constant 0 : i32
    %c0_i32_0 = arith.constant 0 : i32
    %c0_i32_1 = arith.constant 0 : i32
    return %c0_i32, %c0_i32_0 : i32, i32
  }
  func.func @transform_3(%arg0: i32) -> (i32, i32) {
    %c0_i32 = arith.constant 0 : i32
    %c0_i32_0 = arith.constant 0 : i32
    %c0_i32_1 = arith.constant 0 : i32
    return %c0_i32, %c0_i32_0 : i32, i32
  }
}

</mosaic_0001>

<llo_original>
// kernel: tpu_custom_call.1
$region0: #{tpu_custom_call.1}
  #allocation0 [shape = 'u32[]', space=smem, size = 0x4, offset = 0x4, fixed_abs, tag = 'smem constant byte address 0x4 - core index']
  #allocation1 [shape = 'u32[72,128]{1,0:T(1,128)}', space=vmem, size = 0x9000, scoped, tag = 'internal scratch']
  %s0 = inlined_call_operand.vmem [shape: f32[2,4,16], index: 0, kind: input, shape index: {}]
  %s1 = inlined_call_operand.vmem [shape: f32[6,4], index: 1, kind: input, shape index: {}]
  %s2 = inlined_call_operand.vmem [shape: f32[6,1], index: 2, kind: output, shape index: {0}]
  %s3 = inlined_call_operand.vmem [shape: f32[6,1], index: 3, kind: output, shape index: {1}]
  %4 = xla_tuple %s2, %s3
  %s5 = sld [smem:[#allocation0]]
  $region53: #{tpu_custom_call.1} parent=0
    _
  %s7 = ssub.s32 1, %s5
  %s8 = scalar_select 0, %s7, %s5
  loop: start=0, step=1, limit=4
  $region2: #{tpu_custom_call.1} parent=0 // loop_pre_header
    _
  $region3: #{tpu_custom_call.1} parent=0 // loop_header
    %s10 = sphi 0, %s14
    %p11 = scmp.ge.s32.totalorder %s10, 4
    %s20 = sphi 0, %s22
    %s23 = sphi 0, %s20
    %s24 = sphi 0, %s23
    %s40 = sphi 0, %s24
    %s44 = sphi 0, %s44
    %s46 = sphi 0, %s44
    %s47 = sphi 0, %s46
    %s61 = sphi 0, %s47
    %s65 = sphi 0, %s65
    %s67 = sphi 0, %s65
    %s68 = sphi 0, %s67
    %s82 = sphi 0, %s68
    %s86 = sphi 0, %s86
    %s88 = sphi 0, %s86
    %s89 = sphi 0, %s88
    %s103 = sphi 0, %s89
  $region4: #{tpu_custom_call.1} parent=0 // loop_header_branch
    %13 = sbr.rel (%p11) target = $region8
  $region5: #{tpu_custom_call.1} parent=0 // loop_body
    %s15 = ssub.s32 %s10, 1
    %s16 = ssub.s32 %s10, 2
    %s17 = sadd.s32 %s10, 1
    %s18 = ssub.s32 %s10, %s17
    %p19 = scmp.eq.s32.totalorder %s18, 0
    %s21 = sadd.s32 %s20, 1
    %s22 = scalar_select %p19, %s20, %s21
    %p25 = pneg %p19
    %p26 = scmp.eq.s32.totalorder %s10, 1
    %p27 = por %p25, %p26
    %p28 = scmp.ne.s32.totalorder %s20, %s23
    %p29 = scmp.eq.s32.totalorder %s10, 0
    %p30 = por %p28, %p29
    %p31 = scmp.ne.s32.totalorder %s20, %s23
    %p32 = scmp.eq.s32.totalorder %s15, 1
    %p33 = por %p31, %p32
    %p34 = scmp.ne.s32.totalorder %s23, %s24
    %p35 = scmp.eq.s32.totalorder %s15, 0
    %p36 = por %p34, %p35
    %p37 = scmp.ne.s32.totalorder %s23, %s24
    %p38 = scmp.eq.s32.totalorder %s16, 1
    %p39 = por %p37, %p38
    %p41 = scmp.ne.s32.totalorder %s24, %s40
    %p42 = scmp.eq.s32.totalorder %s16, 0
    %p43 = por %p41, %p42
    %s45 = sadd.s32 %s44, 1
    %p48 = scmp.eq.s32.totalorder %s10, 1
    %p49 = scmp.ne.s32.totalorder %s44, %s46
    %p50 = scmp.eq.s32.totalorder %s10, 0
    %p51 = por %p49, %p50
    %p52 = scmp.ne.s32.totalorder %s44, %s46
    %p53 = scmp.eq.s32.totalorder %s15, 1
    %p54 = por %p52, %p53
    %p55 = scmp.ne.s32.totalorder %s46, %s47
    %p56 = scmp.eq.s32.totalorder %s15, 0
    %p57 = por %p55, %p56
    %p58 = scmp.ne.s32.totalorder %s46, %s47
    %p59 = scmp.eq.s32.totalorder %s16, 1
    %p60 = por %p58, %p59
    %p62 = scmp.ne.s32.totalorder %s47, %s61
    %p63 = scmp.eq.s32.totalorder %s16, 0
    %p64 = por %p62, %p63
    %s66 = sadd.s32 %s65, 1
    %p69 = scmp.eq.s32.totalorder %s10, 1
    %p70 = scmp.ne.s32.totalorder %s65, %s67
    %p71 = scmp.eq.s32.totalorder %s10, 0
    %p72 = por %p70, %p71
    %p73 = scmp.ne.s32.totalorder %s65, %s67
    %p74 = scmp.eq.s32.totalorder %s15, 1
    %p75 = por %p73, %p74
    %p76 = scmp.ne.s32.totalorder %s67, %s68
    %p77 = scmp.eq.s32.totalorder %s15, 0
    %p78 = por %p76, %p77
    %p79 = scmp.ne.s32.totalorder %s67, %s68
    %p80 = scmp.eq.s32.totalorder %s16, 1
    %p81 = por %p79, %p80
    %p83 = scmp.ne.s32.totalorder %s68, %s82
    %p84 = scmp.eq.s32.totalorder %s16, 0
    %p85 = por %p83, %p84
    %s87 = sadd.s32 %s86, 1
    %p90 = scmp.eq.s32.totalorder %s10, 1
    %p91 = scmp.ne.s32.totalorder %s86, %s88
    %p92 = scmp.eq.s32.totalorder %s10, 0
    %p93 = por %p91, %p92
    %p94 = scmp.ne.s32.totalorder %s86, %s88
    %p95 = scmp.eq.s32.totalorder %s15, 1
    %p96 = por %p94, %p95
    %p97 = scmp.ne.s32.totalorder %s88, %s89
    %p98 = scmp.eq.s32.totalorder %s15, 0
    %p99 = por %p97, %p98
    %p100 = scmp.ne.s32.totalorder %s88, %s89
    %p101 = scmp.eq.s32.totalorder %s16, 1
    %p102 = por %p100, %p101
    %p104 = scmp.ne.s32.totalorder %s89, %s103
    %p105 = scmp.eq.s32.totalorder %s16, 0
    %p106 = por %p104, %p105
    %p107 = scmp.le.s32.totalorder 1, %s10
    %p108 = scmp.lt.s32.totalorder %s10, 3
    %p109 = pnand %p107, %p108
    %p110 = pneg %p109
    // Predicated region
    $region9: #{tpu_custom_call.1} parent=5 // pred_check
      _
    $region10: #{tpu_custom_call.1} parent=5 // pred_check_branch
      %112 = sbr.rel (%p109) target = $region12
    $region11: #{tpu_custom_call.1} parent=5 // pred_region
      %s113 = ssub.s32 %s10, 1
      // Predicated region
      $region13: #{tpu_custom_call.1} parent=11 // pred_check
        %p114 = pneg %p57
      $region14: #{tpu_custom_call.1} parent=11 // pred_check_branch
        %116 = sbr.rel (%p114) target = $region16
      $region15: #{tpu_custom_call.1} parent=11 // pred_region
        _
      $region16: #{tpu_custom_call.1} parent=11 // pred_fallthru
        _
    $region12: #{tpu_custom_call.1} parent=5 // pred_fallthru
      _
    %p117 = scmp.lt.s32.totalorder %s10, 2
    // Predicated region
    $region17: #{tpu_custom_call.1} parent=5 // pred_check
      %p118 = pneg %p117
    $region18: #{tpu_custom_call.1} parent=5 // pred_check_branch
      %120 = sbr.rel (%p118) target = $region20
    $region19: #{tpu_custom_call.1} parent=5 // pred_region
      // Predicated region
      $region21: #{tpu_custom_call.1} parent=19 // pred_check
        %p121 = pneg %p30
      $region22: #{tpu_custom_call.1} parent=19 // pred_check_branch
        %123 = sbr.rel (%p121) target = $region24
      $region23: #{tpu_custom_call.1} parent=19 // pred_region
        %p124 = scmp.lt.s32.totalorder %s10, 1
        %s125 = scalar_select %p124, %s10, 1
        %s126 = smul.addr %s125, 4
        %s127 = scalar_lea.vmem %s0, %s126
      $region24: #{tpu_custom_call.1} parent=19 // pred_fallthru
        _
    $region20: #{tpu_custom_call.1} parent=5 // pred_fallthru
      _
    %p128 = scmp.le.s32.totalorder 1, %s10
    %p129 = scmp.lt.s32.totalorder %s10, 3
    %p130 = pnand %p128, %p129
    %p131 = pneg %p130
    // Predicated region
    $region25: #{tpu_custom_call.1} parent=5 // pred_check
      _
    $region26: #{tpu_custom_call.1} parent=5 // pred_check_branch
      %133 = sbr.rel (%p130) target = $region28
    $region27: #{tpu_custom_call.1} parent=5 // pred_region
      %s134 = ssub.s32 %s10, 1
      %p135 = scmp.lt.s32.totalorder %s15, 1
      %s136 = scalar_select %p135, %s15, 1
      %s137 = smul.addr %s136, 4
      %s138 = scalar_lea.vmem %s0, %s137
      %p139 = pneg %p36
      %p140 = pneg %p33
      %p141 = pneg %p57
      %p142 = pneg %p54
      %p143 = pneg %p78
      %p144 = pneg %p75
      %p145 = pneg %p99
      %p146 = pneg %p96
      %p147 = scmp.lt.s32.totalorder %s15, 1
      %s148 = scalar_select %p147, %s15, 1
      %s149 = smul.addr %s148, 4
      %s150 = scalar_lea.vmem %s0, %s149
      %p151 = scmp.eq.s32.totalorder %s15, 0
      // Predicated region
      $region29: #{tpu_custom_call.1} parent=27 // pred_check
        %p152 = pneg %p151
      $region30: #{tpu_custom_call.1} parent=27 // pred_check_branch
        %154 = sbr.rel (%p152) target = $region32
      $region31: #{tpu_custom_call.1} parent=27 // pred_region
        %vm155 = vcmask 5120
        %156 = vst.msk [vmem:[%s2] sm:$0x3f] %vm155, 0.0
        %157 = vst.msk [vmem:[%s3] sm:$0x3f] %vm155, 0.0
      $region32: #{tpu_custom_call.1} parent=27 // pred_fallthru
        _
      %v158 = vld [vmem:[%s150] sm:$0xf]
      %v159 = vld [vmem:[%s1] sm:$0x3f]
      %161 = vset.pattern.permute.xlu0 0
      %162 = vperm.xlu0 %161, %v159
      %v163 = vpop.permute.xlu0 %162
      %v165 = vperm.slane %v158, 0
      %v166 = vmul.f32 %v163, %v165
      %167 = vset.pattern.permute.xlu0 1
      %168 = vperm.xlu0 %167, %v159
      %v169 = vpop.permute.xlu0 %168
      %v171 = vperm.slane %v158, 1
      %v172 = vmul.f32 %v169, %v171
      %v173 = vadd.f32 %v166, %v172
      %174 = vset.pattern.permute.xlu0 2
      %175 = vperm.xlu0 %174, %v159
      %v176 = vpop.permute.xlu0 %175
      %v178 = vperm.slane %v158, 2
      %v179 = vmul.f32 %v176, %v178
      %v180 = vadd.f32 %v173, %v179
      %181 = vset.pattern.permute.xlu0 3
      %182 = vperm.xlu0 %181, %v159
      %v183 = vpop.permute.xlu0 %182
      %v185 = vperm.slane %v158, 3
      %v186 = vmul.f32 %v183, %v185
      %v187 = vadd.f32 %v180, %v186
      %vm188 = vcmask 125952
      %v189 = vsel %vm188, %v158, -inf
      %190 = vmax.xlane.f32.xlu0 %v189
      %v191 = vpop.xlane.xlu0 %190
      %v192 = vperm.slane %v191, 0
      %v193 = vmul.f32 %v159, %v192
      %v194 = vperm.slane %v191, 1
      %v195 = vmul.f32 %v159, %v194
      %197 = vrot.lane.b32.xlu0 %v195, 127
      %v198 = vpop.permute.xlu0 %197
      %v200 = vadd.f32 %v193, %v198
      %v201 = vperm.slane %v191, 2
      %v202 = vmul.f32 %v159, %v201
      %204 = vrot.lane.b32.xlu0 %v202, 126
      %v205 = vpop.permute.xlu0 %204
      %v207 = vadd.f32 %v200, %v205
      %v208 = vperm.slane %v191, 3
      %v209 = vmul.f32 %v159, %v208
      %211 = vrot.lane.b32.xlu0 %v209, 125
      %v212 = vpop.permute.xlu0 %211
      %v214 = vadd.f32 %v207, %v212
      %v215 = vld [vmem:[%s2] sm:$0x3f]
      %vm216 = vcmask 128000
      %v217 = vsel %vm216, %v187, 0.0
      %218 = vadd.xlane.f32.xlu0 %v217
      %v219 = vpop.xlane.xlu0 %218
      %v220 = vadd.f32 %v219, %v214
      %v221 = vadd.f32 %v215, %v220
      %vm222 = vcmask 5120
      %223 = vst.msk [vmem:[%s2] sm:$0x3f] %vm222, %v221
      %v224 = vld [vmem:[%s3] sm:$0x3f]
      %v225 = vmul.f32 %v187, %v187
      %v226 = vsel %vm216, %v225, 0.0
      %227 = vadd.xlane.f32.xlu0 %v226
      %v228 = vpop.xlane.xlu0 %227
      %v229 = vmul.f32 %v214, %v214
      %v230 = vadd.f32 %v228, %v229
      %v231 = vadd.f32 %v224, %v230
      %232 = vst.msk [vmem:[%s3] sm:$0x3f] %vm222, %v231
      // Predicated region
      $region33: #{tpu_custom_call.1} parent=27 // pred_check
        %p233 = pneg %p75
      $region34: #{tpu_custom_call.1} parent=27 // pred_check_branch
        %235 = sbr.rel (%p233) target = $region36
      $region35: #{tpu_custom_call.1} parent=27 // pred_region
        _
      $region36: #{tpu_custom_call.1} parent=27 // pred_fallthru
        _
      // Predicated region
      $region37: #{tpu_custom_call.1} parent=27 // pred_check
        %p236 = pneg %p96
      $region38: #{tpu_custom_call.1} parent=27 // pred_check_branch
        %238 = sbr.rel (%p236) target = $region40
      $region39: #{tpu_custom_call.1} parent=27 // pred_region
        _
      $region40: #{tpu_custom_call.1} parent=27 // pred_fallthru
        _
      // Predicated region
      $region41: #{tpu_custom_call.1} parent=27 // pred_check
        %p239 = pneg %p75
      $region42: #{tpu_custom_call.1} parent=27 // pred_check_branch
        %241 = sbr.rel (%p239) target = $region44
      $region43: #{tpu_custom_call.1} parent=27 // pred_region
        _
      $region44: #{tpu_custom_call.1} parent=27 // pred_fallthru
        _
      // Predicated region
      $region45: #{tpu_custom_call.1} parent=27 // pred_check
        %p242 = pneg %p96
      $region46: #{tpu_custom_call.1} parent=27 // pred_check_branch
        %244 = sbr.rel (%p242) target = $region48
      $region47: #{tpu_custom_call.1} parent=27 // pred_region
        _
      $region48: #{tpu_custom_call.1} parent=27 // pred_fallthru
        _
    $region28: #{tpu_custom_call.1} parent=5 // pred_fallthru
      _
    %p245 = scmp.le.s32.totalorder 2, %s10
    // Predicated region
    $region49: #{tpu_custom_call.1} parent=5 // pred_check
      %p246 = pneg %p245
    $region50: #{tpu_custom_call.1} parent=5 // pred_check_branch
      %248 = sbr.rel (%p246) target = $region52
    $region51: #{tpu_custom_call.1} parent=5 // pred_region
      %s249 = ssub.s32 %s10, 2
    $region52: #{tpu_custom_call.1} parent=5 // pred_fallthru
      _
  $region6: #{tpu_custom_call.1} parent=0 // loop_footer
    %s14 = sadd.s32 1, %s10
  $region7: #{tpu_custom_call.1} parent=0 // loop_footer_branch
    %9 = sbr.rel target = $region3
  $region8: #{tpu_custom_call.1} parent=0 // loop_exit
    _

</llo_original>
